<compile_context>
chip_gen: v7x
topology: tpu7x:2x2x1
jax: 0.10.0
libtpu: 0.0.40
codegen_flags: <defaults>
</compile_context>

<pallas_src>
import jax
import jax.numpy as jnp
from jax.experimental import pallas as pl
from jax.experimental.pallas import tpu as pltpu


def _pick_tb(b):
    # Largest tile that divides B while leaving >= 2 grid steps (keeps both
    # v7x TensorCores busy via the "parallel" batch axis).  Per-step VMEM at
    # TB=2048 is only a few MiB, well under the 32 MiB scoped limit we set.
    for tb in (2048, 1024, 512, 256, 128, 64, 32, 16, 8):
        if b % tb == 0 and b // tb >= 2:
            return tb
    return b  # full-extent block (grid of 1) -- always legal


def cnn1d_pallas(x, P):
    f32, bf16 = jnp.float32, jnp.bfloat16
    B, cin, L = x.shape
    assert cin == 1 and L == 8, "fc1 expects 64 = 32 * (L // 4) features -> L must be 8"
    C1, C2 = 16, 32
    H = P["wfc1"].shape[0]            # 128
    OUT = P["wfc2"].shape[0]          # 1
    assert OUT == 1 and H == 128, "fc2 is lowered to a lane reduction (OUT == 1)"
    L2, L3 = L // 2, L // 4
    n1, n2 = L * C1, L2 * C2          # 128, 128
    eps = 1e-5

    # ------------- plain-JAX glue: fold / pack parameters (tiny, once) -------
    x2 = x.astype(f32).reshape(B, L)

    # conv1 as a (L, L*C1) matmul: W1[t_in, t_out*C1 + c] = w1[c, 0, t_in-t_out+1]
    w1 = P["w1"].astype(f32)                                    # (C1, 1, 3)
    tin = jnp.arange(L)[:, None]
    tout = jnp.arange(L)[None, :]
    k = tin - tout + 1
    valid = (k >= 0) & (k <= 2)
    taps1 = w1[:, 0, :].T                                       # (3, C1)
    W1 = jnp.where(valid[:, :, None], taps1[jnp.clip(k, 0, 2)], 0.0).reshape(L, n1)

    # bn1 (eval) folded into conv1 weight/bias (exact algebra, no kernel work).
    inv1 = (P["gamma1"] / jnp.sqrt(P["rv1"] + eps)).astype(f32)
    W1f = (W1 * jnp.tile(inv1, L).reshape(1, n1)).astype(bf16)
    c1 = jnp.tile(P["b1"].astype(f32) * inv1
                  + P["beta1"].astype(f32) - P["rm1"].astype(f32) * inv1,
                  L).reshape(1, n1)

    # conv2 weight with the maxpool1 even-time selection folded in: (L*C1, L2*C2)
    w2 = P["w2"].astype(f32)                                    # (C2, C1, 3)
    tin2 = jnp.arange(L2)[:, None]
    tout2 = jnp.arange(L2)[None, :]
    k2 = tin2 - tout2 + 1
    valid2 = (k2 >= 0) & (k2 <= 2)
    taps2 = jnp.transpose(w2, (2, 1, 0))                        # (3, C1, C2)
    W2big = jnp.where(valid2[:, :, None, None], taps2[jnp.clip(k2, 0, 2)], 0.0)
    W2big = jnp.transpose(W2big, (0, 2, 1, 3)).reshape(L2 * C1, n2)
    W2 = (jnp.zeros((L, C1, n2), f32)
          .at[0::2].set(W2big.reshape(L2, C1, n2))
          .reshape(n1, n2))

    inv2 = (P["gamma2"] / jnp.sqrt(P["rv2"] + eps)).astype(f32)
    W2f = (W2 * jnp.tile(inv2, L2).reshape(1, n2)).astype(bf16)
    c2 = jnp.tile(P["b2"].astype(f32) * inv2
                  + P["beta2"].astype(f32) - P["rm2"].astype(f32) * inv2,
                  L2).reshape(1, n2)

    # fc1 weight with maxpool2 selection + torch flatten order (c2*L3 + t) folded in.
    wfc1 = P["wfc1"].astype(f32)                                # (H, C2*L3)
    Wfc1p = jnp.transpose(wfc1.reshape(H, C2, L3), (2, 1, 0)).reshape(L3 * C2, H)
    Wf1 = (jnp.zeros((L2, C2, H), f32)
           .at[0::2].set(Wfc1p.reshape(L3, C2, H))
           .reshape(n2, H)).astype(bf16)
    bf1 = P["bfc1"].reshape(1, H).astype(f32)

    # fc2 (OUT == 1) as a lane reduction: weight row + (bias / H) row.  Summing
    # the per-lane bias over the H lanes reproduces the scalar bias exactly.
    w_out = P["wfc2"].astype(f32).reshape(1, H)
    b_out = jnp.broadcast_to(P["bfc2"].astype(f32) / H, (1, H))

    # Pack the small per-lane vectors into one (5, 128) operand (fewer DMAs).
    vecs = jnp.concatenate([c1, c2, bf1, w_out, b_out], axis=0)

    TB = _pick_tb(B)
    grid = (B // TB,)

    # ------------- the Pallas kernel: the whole forward pass per tile --------
    def kernel(x_ref, w1_ref, w2_ref, wf1_ref, vec_ref, out_ref):
        c1v = vec_ref[0:1, :]
        c2v = vec_ref[1:2, :]
        bf1v = vec_ref[2:3, :]
        woutv = vec_ref[3:4, :]
        boutv = vec_ref[4:5, :]

        # conv1 + folded bn1 + relu -> (TB, L*C1 = 128).  bf16 MXU, f32 acc.
        xt = x_ref[...].astype(jnp.bfloat16)
        h1 = jnp.dot(xt, w1_ref[...], preferred_element_type=jnp.float32) + c1v
        h1 = jnp.maximum(h1, 0.0)

        # maxpool1: lane roll by C1 pairs time t with t+1; even-time selection
        # is baked into W2f (odd-t rows are zero), so pool1+conv2+bn2 is a
        # single K=128 matmul.
        m1 = jnp.maximum(h1, pltpu.roll(h1, shift=n1 - C1, axis=1))
        h2 = jnp.dot(m1.astype(jnp.bfloat16), w2_ref[...],
                     preferred_element_type=jnp.float32) + c2v
        h2 = jnp.maximum(h2, 0.0)

        # maxpool2 + torch-order flatten + fc1, all fused into wf1.  + relu.
        m2 = jnp.maximum(h2, pltpu.roll(h2, shift=n2 - C2, axis=1))
        f1 = jnp.maximum(
            jnp.dot(m2.astype(jnp.bfloat16), wf1_ref[...],
                    preferred_element_type=jnp.float32) + bf1v, 0.0)

        # fc2 (OUT=1): VPU broadcast-multiply + lane reduction (no MXU pass),
        # then sigmoid; store the unpadded (TB, 1) column directly.
        f2 = jnp.sum(f1 * woutv + boutv, axis=-1, keepdims=True)
        out_ref[...] = jax.nn.sigmoid(f2)

    out = pl.pallas_call(
        kernel,
        out_shape=jax.ShapeDtypeStruct((B, OUT), f32),
        grid=grid,
        in_specs=[
            pl.BlockSpec((TB, L), lambda i: (i, 0)),
            pl.BlockSpec((L, n1), lambda i: (0, 0)),
            pl.BlockSpec((n1, n2), lambda i: (0, 0)),
            pl.BlockSpec((n2, H), lambda i: (0, 0)),
            pl.BlockSpec((5, H), lambda i: (0, 0)),
        ],
        out_specs=pl.BlockSpec((TB, OUT), lambda i: (i, 0)),
        compiler_params=pltpu.CompilerParams(
            dimension_semantics=("parallel",),
            vmem_limit_bytes=32 * 1024 * 1024),
    )(x2, W1f, W2f, Wf1, vecs)

    return out


# ---------------- pure-JAX reference (matches PyTorch eval-mode forward) ----
def cnn1d_reference(x, P):
    eps = 1e-5
    B = x.shape[0]

    def conv1d_same(h, w, b):
        L = h.shape[-1]
        hp = jnp.pad(h, ((0, 0), (0, 0), (1, 1)))
        y = b[None, :, None]
        for k in range(3):
            y = y + jnp.einsum("oc,bcl->bol", w[:, :, k], hp[:, :, k:k + L])
        return y

    def bn_eval(h, g, bta, rm, rv):
        return ((h - rm[None, :, None]) / jnp.sqrt(rv + eps)[None, :, None]
                * g[None, :, None] + bta[None, :, None])

    y = conv1d_same(x, P["w1"], P["b1"])
    y = jax.nn.relu(bn_eval(y, P["gamma1"], P["beta1"], P["rm1"], P["rv1"]))
    y = y.reshape(B, 16, y.shape[-1] // 2, 2).max(-1)
    y = conv1d_same(y, P["w2"], P["b2"])
    y = jax.nn.relu(bn_eval(y, P["gamma2"], P["beta2"], P["rm2"], P["rv2"]))
    y = y.reshape(B, 32, y.shape[-1] // 2, 2).max(-1)
    y = y.reshape(B, -1)                                      # (B, 64), index c*2+t
    y = jax.nn.relu(y @ P["wfc1"].T + P["bfc1"])
    y = y @ P["wfc2"].T + P["bfc2"]
    return jax.nn.sigmoid(y)


if __name__ == "__main__":
    L = 8
    keys = jax.random.split(jax.random.PRNGKey(0), 16)
    f32 = jnp.float32

    P = {
        "w1": 0.5 * jax.random.normal(keys[1], (16, 1, 3), f32),
        "b1": 0.1 * jax.random.normal(keys[2], (16,), f32),
        "gamma1": 1.0 + 0.1 * jax.random.normal(keys[3], (16,), f32),
        "beta1": 0.1 * jax.random.normal(keys[4], (16,), f32),
        "rm1": jnp.zeros((16,), f32), "rv1": jnp.ones((16,), f32),
        "w2": 0.2 * jax.random.normal(keys[5], (32, 16, 3), f32),
        "b2": 0.1 * jax.random.normal(keys[6], (32,), f32),
        "gamma2": 1.0 + 0.1 * jax.random.normal(keys[7], (32,), f32),
        "beta2": 0.1 * jax.random.normal(keys[8], (32,), f32),
        "rm2": jnp.zeros((32,), f32), "rv2": jnp.ones((32,), f32),
        "wfc1": 0.1 * jax.random.normal(keys[9], (128, 64), f32),
        "bfc1": 0.1 * jax.random.normal(keys[10], (128,), f32),
        "wfc2": 0.1 * jax.random.normal(keys[11], (1, 128), f32),
        "bfc2": 0.1 * jax.random.normal(keys[12], (1,), f32),
    }

    # bf16 MXU operands (f32 accumulate) -> slightly looser tolerance than f32.
    RTOL, ATOL = 3e-2, 3e-2

    # small test (batch=2) -- full-extent block, grid=(1,)
    B = 2
    x = jax.random.normal(keys[0], (B, 1, L), f32)            # NCW, like PyTorch Conv1d
    out = jax.block_until_ready(cnn1d_pallas(x, P))
    ref = cnn1d_reference(x, P)
    assert out.shape == (B, 1), out.shape
    assert jnp.allclose(out, ref, rtol=RTOL, atol=ATOL), (out, ref)

    # gridded test (batch=1024 -> TB=512, grid=(2,)) exercises the pipelined path
    Bg = 1024
    xg = jax.random.normal(keys[13], (Bg, 1, L), f32)
    outg = jax.block_until_ready(cnn1d_pallas(xg, P))
    refg = cnn1d_reference(xg, P)
    assert outg.shape == (Bg, 1), outg.shape
    assert jnp.allclose(outg, refg, rtol=RTOL, atol=ATOL)

    print("KERNEL_OK")
</pallas_src>

<mosaic_0001>
module attributes {stable_mosaic.version = 11 : i64} {
  func.func @kernel(%arg0: i32, %arg1: memref<2x8xf32, #tpu.memory_space<vmem>>, %arg2: memref<8x128xbf16, #tpu.memory_space<vmem>>, %arg3: memref<128x128xbf16, #tpu.memory_space<vmem>>, %arg4: memref<128x128xbf16, #tpu.memory_space<vmem>>, %arg5: memref<5x128xf32, #tpu.memory_space<vmem>>, %arg6: memref<2x1xf32, #tpu.memory_space<vmem>>) attributes {dimension_semantics = [#tpu.dimension_semantics<parallel>], iteration_bounds = array<i64: 1>, scalar_prefetch = 0 : i64, scratch_operands = 0 : i64, tpu.core_type = #tpu.core_type<tc>, window_params = [{transform_indices = @transform_0, window_bounds = array<i64: 2, 8>}, {pipeline_mode = #tpu.pipeline_mode<synchronous>, transform_indices = @transform_1, window_bounds = array<i64: 8, 128>}, {pipeline_mode = #tpu.pipeline_mode<synchronous>, transform_indices = @transform_2, window_bounds = array<i64: 128, 128>}, {pipeline_mode = #tpu.pipeline_mode<synchronous>, transform_indices = @transform_3, window_bounds = array<i64: 128, 128>}, {pipeline_mode = #tpu.pipeline_mode<synchronous>, transform_indices = @transform_4, window_bounds = array<i64: 5, 128>}, {transform_indices = @transform_5, window_bounds = array<i64: 2, 1>}]} {
    %c0 = arith.constant 0 : index
    %c0_0 = arith.constant 0 : index
    %0 = vector.load %arg5[%c0, %c0_0] : memref<5x128xf32, #tpu.memory_space<vmem>>, vector<1x128xf32>
    %c1 = arith.constant 1 : index
    %c0_1 = arith.constant 0 : index
    %1 = vector.load %arg5[%c1, %c0_1] : memref<5x128xf32, #tpu.memory_space<vmem>>, vector<1x128xf32>
    %c2 = arith.constant 2 : index
    %c0_2 = arith.constant 0 : index
    %2 = vector.load %arg5[%c2, %c0_2] : memref<5x128xf32, #tpu.memory_space<vmem>>, vector<1x128xf32>
    %c3 = arith.constant 3 : index
    %c0_3 = arith.constant 0 : index
    %3 = vector.load %arg5[%c3, %c0_3] : memref<5x128xf32, #tpu.memory_space<vmem>>, vector<1x128xf32>
    %c4 = arith.constant 4 : index
    %c0_4 = arith.constant 0 : index
    %4 = vector.load %arg5[%c4, %c0_4] : memref<5x128xf32, #tpu.memory_space<vmem>>, vector<1x128xf32>
    %c0_5 = arith.constant 0 : index
    %c0_6 = arith.constant 0 : index
    %5 = vector.load %arg1[%c0_5, %c0_6] : memref<2x8xf32, #tpu.memory_space<vmem>>, vector<2x8xf32>
    %6 = arith.truncf %5 : vector<2x8xf32> to vector<2x8xbf16>
    %c0_7 = arith.constant 0 : index
    %c0_8 = arith.constant 0 : index
    %7 = vector.load %arg2[%c0_7, %c0_8] : memref<8x128xbf16, #tpu.memory_space<vmem>>, vector<8x128xbf16>
    %cst = arith.constant dense<0.000000e+00> : vector<2x128xf32>
    %8 = tpu.matmul %6, %7, %cst {dimension_numbers = #tpu.dot_dimension_numbers<[1], [0], [0], [1], [0, 0, 1, 1], [], []>} : vector<2x8xbf16>, vector<8x128xbf16>, vector<2x128xf32> -> vector<2x128xf32>
    %9 = vector.broadcast %0 : vector<1x128xf32> to vector<2x128xf32>
    %10 = arith.addf %8, %9 : vector<2x128xf32>
    %cst_9 = arith.constant 0.000000e+00 : f32
    %11 = vector.broadcast %cst_9 : f32 to vector<2x128xf32>
    %12 = arith.maximumf %10, %11 : vector<2x128xf32>
    %c112_i32 = arith.constant 112 : i32
    %13 = tpu.dynamic_rotate %12 by %c112_i32 dim 1 : vector<2x128xf32>, i32 -> vector<2x128xf32>
    %14 = arith.maximumf %12, %13 : vector<2x128xf32>
    %15 = arith.truncf %14 : vector<2x128xf32> to vector<2x128xbf16>
    %c0_10 = arith.constant 0 : index
    %c0_11 = arith.constant 0 : index
    %16 = vector.load %arg3[%c0_10, %c0_11] : memref<128x128xbf16, #tpu.memory_space<vmem>>, vector<128x128xbf16>
    %cst_12 = arith.constant dense<0.000000e+00> : vector<2x128xf32>
    %17 = tpu.matmul %15, %16, %cst_12 {dimension_numbers = #tpu.dot_dimension_numbers<[1], [0], [0], [1], [0, 0, 1, 1], [], []>} : vector<2x128xbf16>, vector<128x128xbf16>, vector<2x128xf32> -> vector<2x128xf32>
    %18 = vector.broadcast %1 : vector<1x128xf32> to vector<2x128xf32>
    %19 = arith.addf %17, %18 : vector<2x128xf32>
    %cst_13 = arith.constant 0.000000e+00 : f32
    %20 = vector.broadcast %cst_13 : f32 to vector<2x128xf32>
    %21 = arith.maximumf %19, %20 : vector<2x128xf32>
    %c96_i32 = arith.constant 96 : i32
    %22 = tpu.dynamic_rotate %21 by %c96_i32 dim 1 : vector<2x128xf32>, i32 -> vector<2x128xf32>
    %23 = arith.maximumf %21, %22 : vector<2x128xf32>
    %24 = arith.truncf %23 : vector<2x128xf32> to vector<2x128xbf16>
    %c0_14 = arith.constant 0 : index
    %c0_15 = arith.constant 0 : index
    %25 = vector.load %arg4[%c0_14, %c0_15] : memref<128x128xbf16, #tpu.memory_space<vmem>>, vector<128x128xbf16>
    %cst_16 = arith.constant dense<0.000000e+00> : vector<2x128xf32>
    %26 = tpu.matmul %24, %25, %cst_16 {dimension_numbers = #tpu.dot_dimension_numbers<[1], [0], [0], [1], [0, 0, 1, 1], [], []>} : vector<2x128xbf16>, vector<128x128xbf16>, vector<2x128xf32> -> vector<2x128xf32>
    %27 = vector.broadcast %2 : vector<1x128xf32> to vector<2x128xf32>
    %28 = arith.addf %26, %27 : vector<2x128xf32>
    %cst_17 = arith.constant 0.000000e+00 : f32
    %29 = vector.broadcast %cst_17 : f32 to vector<2x128xf32>
    %30 = arith.maximumf %28, %29 : vector<2x128xf32>
    %31 = vector.broadcast %3 : vector<1x128xf32> to vector<2x128xf32>
    %32 = arith.mulf %30, %31 : vector<2x128xf32>
    %33 = vector.broadcast %4 : vector<1x128xf32> to vector<2x128xf32>
    %34 = arith.addf %32, %33 : vector<2x128xf32>
    %cst_18 = arith.constant dense<0.000000e+00> : vector<2xf32>
    %35 = vector.multi_reduction <add>, %34, %cst_18 [1] : vector<2x128xf32> to vector<2xf32>
    %36 = vector.shape_cast %35 : vector<2xf32> to vector<2x1xf32>
    %37 = arith.negf %36 : vector<2x1xf32>
    %38 = math.exp %37 : vector<2x1xf32>
    %cst_19 = arith.constant 1.000000e+00 : f32
    %39 = vector.broadcast %cst_19 : f32 to vector<2x1xf32>
    %40 = arith.addf %39, %38 : vector<2x1xf32>
    %41 = arith.divf %39, %40 : vector<2x1xf32>
    %c0_20 = arith.constant 0 : index
    %c0_21 = arith.constant 0 : index
    %42 = vector.load %arg6[%c0_20, %c0_21] : memref<2x1xf32, #tpu.memory_space<vmem>>, vector<2x1xf32>
    tpu.vector_store %arg6[%c0_20, %c0_21], %41 {strides = array<i32>} : memref<2x1xf32, #tpu.memory_space<vmem>>, vector<2x1xf32>,
    return
  }
  func.func @transform_0(%arg0: i32) -> (i32, i32) {
    %c0_i32 = arith.constant 0 : i32
    %c0_i32_0 = arith.constant 0 : i32
    return %arg0, %c0_i32 : i32, i32
  }
  func.func @transform_1(%arg0: i32) -> (i32, i32) {
    %c0_i32 = arith.constant 0 : i32
    %c0_i32_0 = arith.constant 0 : i32
    %c0_i32_1 = arith.constant 0 : i32
    return %c0_i32, %c0_i32_0 : i32, i32
  }
  func.func @transform_2(%arg0: i32) -> (i32, i32) {
    %c0_i32 = arith.constant 0 : i32
    %c0_i32_0 = arith.constant 0 : i32
    %c0_i32_1 = arith.constant 0 : i32
    return %c0_i32, %c0_i32_0 : i32, i32
  }
  func.func @transform_3(%arg0: i32) -> (i32, i32) {
    %c0_i32 = arith.constant 0 : i32
    %c0_i32_0 = arith.constant 0 : i32
    %c0_i32_1 = arith.constant 0 : i32
    return %c0_i32, %c0_i32_0 : i32, i32
  }
  func.func @transform_4(%arg0: i32) -> (i32, i32) {
    %c0_i32 = arith.constant 0 : i32
    %c0_i32_0 = arith.constant 0 : i32
    %c0_i32_1 = arith.constant 0 : i32
    return %c0_i32, %c0_i32_0 : i32, i32
  }
  func.func @transform_5(%arg0: i32) -> (i32, i32) {
    %c0_i32 = arith.constant 0 : i32
    %c0_i32_0 = arith.constant 0 : i32
    return %arg0, %c0_i32 : i32, i32
  }
}

</mosaic_0001>

<llo_original>
// kernel: tpu_custom_call.1
$region0: #{tpu_custom_call.1}
  #allocation0 [shape = 'u32[]', space=smem, size = 0x4, offset = 0x4, fixed_abs, tag = 'smem constant byte address 0x4 - core index']
  #allocation1 [shape = 'u32[144,128]{1,0:T(1,128)}', space=vmem, size = 0x12000, scoped, tag = 'internal scratch']
  %s0 = inlined_call_operand.hbm [shape: f32[2,8], index: 0, kind: input, shape index: {}]
  %s1 = inlined_call_operand.hbm [shape: bf16[8,128], index: 1, kind: input, shape index: {}]
  %s2 = inlined_call_operand.hbm [shape: bf16[128,128], index: 2, kind: input, shape index: {}]
  %s3 = inlined_call_operand.hbm [shape: bf16[128,128], index: 3, kind: input, shape index: {}]
  %s4 = inlined_call_operand.vmem [shape: f32[5,128], index: 4, kind: input, shape index: {}]
  %s5 = inlined_call_operand.vmem [shape: f32[2,1], index: 5, kind: output, shape index: {}]
  %s6 = sld [smem:[#allocation0]]
  $region46: #{tpu_custom_call.1} parent=0
    _
  %s8 = ssub.s32 1, %s6
  %s9 = scalar_select 0, %s8, %s6
  $region1: #{tpu_custom_call.1} parent=0
    #allocation2 [shape = 'u8[1024]{0}', space=vmem, size = 0x400, scoped, tag = 'input window, operand 0, single buffered']
    #allocation3 [shape = 's32[1]{0}', space=sflag, size = 0x4, scoped, tag = 'scoped memory for tpu_custom_call.1']
    #allocation4 [shape = 'u8[2048]{0}', space=vmem, size = 0x800, scoped, tag = 'input window, operand 1, single buffered']
    #allocation5 [shape = 's32[1]{0}', space=sflag, size = 0x4, scoped, tag = 'scoped memory for tpu_custom_call.1']
    #allocation6 [shape = 'u8[32768]{0}', space=vmem, size = 0x8000, scoped, tag = 'input window, operand 2, single buffered']
    #allocation7 [shape = 'u8[32768]{0}', space=vmem, size = 0x8000, scoped, tag = 'input window, operand 3, single buffered']
    #allocation8 [shape = 's32[1]{0}', space=sflag, size = 0x4, scoped, tag = 'scoped memory for tpu_custom_call.1']
    %10 = vsyncpa [#allocation3], 0
    %11 = vsyncpa [#allocation5], 0
    %12 = vsyncpa [#allocation8], 0
    // Predicated region
    $region2: #{tpu_custom_call.1} parent=1 // pred_check
      _
    $region3: #{tpu_custom_call.1} parent=1 // pred_check_branch
      %14 = sbr.rel (0) target = $region5
    $region4: #{tpu_custom_call.1} parent=1 // pred_region
      %s16 = ssub.s32 32, 32
      %17 = vsyncadd [#allocation3], %s16
      %s19 = sshll.u32 [#allocation2], 4
      %s20 = int_to_ptr.vmem [resolvable:$true] %s19
      %22 = dma.hbm_to_vmem [thread:$0]  %s0, 32, %s20, [#allocation3]
    $region5: #{tpu_custom_call.1} parent=1 // pred_fallthru
      _
    // Predicated region
    $region6: #{tpu_custom_call.1} parent=1 // pred_check
      _
    $region7: #{tpu_custom_call.1} parent=1 // pred_check_branch
      %24 = sbr.rel (0) target = $region9
    $region8: #{tpu_custom_call.1} parent=1 // pred_region
      %s26 = ssub.s32 64, 64
      %27 = vsyncadd [#allocation5], %s26
      %s29 = sshll.u32 [#allocation4], 4
      %s30 = int_to_ptr.vmem [resolvable:$true] %s29
      %32 = dma.hbm_to_vmem [thread:$0]  %s1, 64, %s30, [#allocation5]
    $region9: #{tpu_custom_call.1} parent=1 // pred_fallthru
      _
    // Predicated region
    $region10: #{tpu_custom_call.1} parent=1 // pred_check
      _
    $region11: #{tpu_custom_call.1} parent=1 // pred_check_branch
      %34 = sbr.rel (0) target = $region13
    $region12: #{tpu_custom_call.1} parent=1 // pred_region
      %s36 = ssub.s32 1024, 1024
      %37 = vsyncadd [#allocation5], %s36
      %s38 = sshll.u32 [#allocation6], 4
      %s39 = int_to_ptr.vmem [resolvable:$true] %s38
      %44 = dma.hbm_to_vmem [thread:$0]  %s2, 1024, %s39, [#allocation5], 64, 64, 4
    $region13: #{tpu_custom_call.1} parent=1 // pred_fallthru
      _
    // Predicated region
    $region14: #{tpu_custom_call.1} parent=1 // pred_check
      _
    $region15: #{tpu_custom_call.1} parent=1 // pred_check_branch
      %46 = sbr.rel (0) target = $region17
    $region16: #{tpu_custom_call.1} parent=1 // pred_region
      %s48 = ssub.s32 1024, 1024
      %49 = vsyncadd [#allocation8], %s48
      %s50 = sshll.u32 [#allocation7], 4
      %s51 = int_to_ptr.vmem [resolvable:$true] %s50
      %56 = dma.hbm_to_vmem [thread:$0]  %s3, 1024, %s51, [#allocation8], 64, 64, 4
    $region17: #{tpu_custom_call.1} parent=1 // pred_fallthru
      _
    // Predicated region
    $region18: #{tpu_custom_call.1} parent=1 // pred_check
      _
    $region19: #{tpu_custom_call.1} parent=1 // pred_check_branch
      %58 = sbr.rel (0) target = $region21
    $region20: #{tpu_custom_call.1} parent=1 // pred_region
      _
    $region21: #{tpu_custom_call.1} parent=1 // pred_fallthru
      _
    // Predicated region
    $region22: #{tpu_custom_call.1} parent=1 // pred_check
      _
    $region23: #{tpu_custom_call.1} parent=1 // pred_check_branch
      %60 = sbr.rel (0) target = $region25
    $region24: #{tpu_custom_call.1} parent=1 // pred_region
      %61 = dma.done [#allocation3], 32
    $region25: #{tpu_custom_call.1} parent=1 // pred_fallthru
      _
    // Predicated region
    $region26: #{tpu_custom_call.1} parent=1 // pred_check
      _
    $region27: #{tpu_custom_call.1} parent=1 // pred_check_branch
      %63 = sbr.rel (0) target = $region29
    $region28: #{tpu_custom_call.1} parent=1 // pred_region
      %64 = dma.done [#allocation5], 64
    $region29: #{tpu_custom_call.1} parent=1 // pred_fallthru
      _
    // Predicated region
    $region30: #{tpu_custom_call.1} parent=1 // pred_check
      _
    $region31: #{tpu_custom_call.1} parent=1 // pred_check_branch
      %66 = sbr.rel (0) target = $region33
    $region32: #{tpu_custom_call.1} parent=1 // pred_region
      %67 = dma.done [#allocation5], 1024
    $region33: #{tpu_custom_call.1} parent=1 // pred_fallthru
      _
    // Predicated region
    $region34: #{tpu_custom_call.1} parent=1 // pred_check
      _
    $region35: #{tpu_custom_call.1} parent=1 // pred_check_branch
      %69 = sbr.rel (0) target = $region37
    $region36: #{tpu_custom_call.1} parent=1 // pred_region
      %70 = dma.done [#allocation8], 1024
    $region37: #{tpu_custom_call.1} parent=1 // pred_fallthru
      _
    %v72 = vld [vmem:[%s4] sm:$0x1]
    %v73 = vld [vmem:[%s4 + $0x1] sm:$0x1]
    %v74 = vld [vmem:[%s4 + $0x2] sm:$0x1]
    %v75 = vld [vmem:[%s4 + $0x3] sm:$0x1]
    %v76 = vld [vmem:[%s4 + $0x4] sm:$0x1]
    %v77 = vld [vmem:[#allocation2] sm:$0x3]
    %v78 = vpack.c.bf16 %v77, %v77
    %v79 = vld [vmem:[#allocation4] sm:$0xf]
    %v80 = vlaneseq
    %v81 = vshrl.u32 %v80, 7
    %v82 = vsub.s32 0, %v81
    %v83 = vrot.slane %v72, %v82
    %vm84 = vcmask 64512
    %v86 = vsel %vm84, %v78, 0
    %vm88 = vcmask 1043456
    %v90 = vsel %vm88, %v79, 0
    %92 = vmatprep.subr.bf16.mxu0 0
    %93 = vmatpush1.bf16.msra.mxu0 %v90
    %94 = vmatprep.subr.bf16.mxu0 0
    %95 = vmatpush1.bf16.msra.mxu0 0
    %96 = vmatprep.subr.bf16.mxu0 0
    %97 = vmatpush1.bf16.msra.mxu0 0
    %98 = vmatprep.subr.bf16.mxu0 0
    %99 = vmatpush1.bf16.msra.mxu0 0
    %100 = vmatprep.subr.bf16.mxu0 0
    %101 = vmatpush1.bf16.msra.mxu0 0
    %102 = vmatprep.subr.bf16.mxu0 0
    %103 = vmatpush1.bf16.msra.mxu0 0
    %104 = vmatprep.subr.bf16.mxu0 0
    %105 = vmatpush1.bf16.msra.mxu0 0
    %106 = vmatprep.subr.bf16.mxu0 0
    %107 = vmatpush1.bf16.msra.mxu0 0
    %108 = vmatprep.subr.bf16.mxu0 0
    %109 = vmatpush1.bf16.msra.mxu0 0
    %110 = vmatprep.subr.bf16.mxu0 0
    %111 = vmatpush1.bf16.msra.mxu0 0
    %112 = vmatprep.subr.bf16.mxu0 0
    %113 = vmatpush1.bf16.msra.mxu0 0
    %114 = vmatprep.subr.bf16.mxu0 0
    %115 = vmatpush1.bf16.msra.mxu0 0
    %116 = vmatprep.subr.bf16.mxu0 0
    %117 = vmatpush1.bf16.msra.mxu0 0
    %118 = vmatprep.subr.bf16.mxu0 0
    %119 = vmatpush1.bf16.msra.mxu0 0
    %120 = vmatprep.subr.bf16.mxu0 0
    %121 = vmatpush1.bf16.msra.mxu0 0
    %122 = vmatprep.subr.bf16.mxu0 0
    %123 = vmatpush1.bf16.msra.mxu0 0
    %124 = vmatprep.mubr.bf16.mxu0 0
    %125 = vmatmul.mubr.bf16.gmra.mrb[0].mxu0 %v86
    %v126 = vpop.f32.mrb[0].mxu0
    %v127 = vadd.f32 %v83, %v126
    %v128 = vpop.f32.mrb[0].mxu0
    %v129 = vpop.f32.mrb[0].mxu0
    %v130 = vpop.f32.mrb[0].mxu0
    %131 = vdwg.mxu0
    %v132 = vmax.f32 %v127, 0.0
    %133 = vrot.lane.b32.xlu0 %v132, 112
    %v134 = vpop.permute.xlu0 %133
    %v135 = vmax.f32 %v132, %v134
    %v136 = vpack.c.bf16 %v135, %v135
    %v137 = vld [vmem:[#allocation6] sm:$0xf]
    %v138 = vld [vmem:[#allocation6 + $0x4] sm:$0xf]
    %v139 = vld [vmem:[#allocation6 + $0x8] sm:$0xf]
    %v140 = vld [vmem:[#allocation6 + $0xc] sm:$0xf]
    %v141 = vld [vmem:[#allocation6 + $0x10] sm:$0xf]
    %v142 = vld [vmem:[#allocation6 + $0x14] sm:$0xf]
    %v143 = vld [vmem:[#allocation6 + $0x18] sm:$0xf]
    %v144 = vld [vmem:[#allocation6 + $0x1c] sm:$0xf]
    %v145 = vld [vmem:[#allocation6 + $0x20] sm:$0xf]
    %v146 = vld [vmem:[#allocation6 + $0x24] sm:$0xf]
    %v147 = vld [vmem:[#allocation6 + $0x28] sm:$0xf]
    %v148 = vld [vmem:[#allocation6 + $0x2c] sm:$0xf]
    %v149 = vld [vmem:[#allocation6 + $0x30] sm:$0xf]
    %v150 = vld [vmem:[#allocation6 + $0x34] sm:$0xf]
    %v151 = vld [vmem:[#allocation6 + $0x38] sm:$0xf]
    %v152 = vld [vmem:[#allocation6 + $0x3c] sm:$0xf]
    %v153 = vlaneseq
    %v154 = vshrl.u32 %v153, 7
    %v155 = vsub.s32 0, %v154
    %v156 = vrot.slane %v73, %v155
    %v173 = vunpack.c.l.b16 %v137
    %v174 = vunpack.c.l.b16 %v138
    %v175 = vunpack.c.l.b16 %v139
    %v176 = vunpack.c.l.b16 %v140
    %v177 = vunpack.c.l.b16 %v141
    %v178 = vunpack.c.l.b16 %v142
    %v179 = vunpack.c.l.b16 %v143
    %v180 = vunpack.c.l.b16 %v144
    %v181 = vunpack.c.l.b16 %v145
    %v182 = vunpack.c.l.b16 %v146
    %v183 = vunpack.c.l.b16 %v147
    %v184 = vunpack.c.l.b16 %v148
    %v185 = vunpack.c.l.b16 %v149
    %v186 = vunpack.c.l.b16 %v150
    %v187 = vunpack.c.l.b16 %v151
    %v188 = vunpack.c.l.b16 %v152
    %v189 = vpack.c.b16 %v174, %v173
    %v190 = vpack.c.b16 %v176, %v175
    %v191 = vpack.c.b16 %v178, %v177
    %v192 = vpack.c.b16 %v180, %v179
    %v193 = vpack.c.b16 %v182, %v181
    %v194 = vpack.c.b16 %v184, %v183
    %v195 = vpack.c.b16 %v186, %v185
    %v196 = vpack.c.b16 %v188, %v187
    %205 = vmatprep.subr.bf16.mxu0 0
    %206 = vmatpush1.bf16.msra.mxu0 %v189
    %207 = vmatprep.subr.bf16.mxu0 0
    %208 = vmatpush1.bf16.msra.mxu0 %v190
    %209 = vmatprep.subr.bf16.mxu0 0
    %210 = vmatpush1.bf16.msra.mxu0 %v191
    %211 = vmatprep.subr.bf16.mxu0 0
    %212 = vmatpush1.bf16.msra.mxu0 %v192
    %213 = vmatprep.subr.bf16.mxu0 0
    %214 = vmatpush1.bf16.msra.mxu0 %v193
    %215 = vmatprep.subr.bf16.mxu0 0
    %216 = vmatpush1.bf16.msra.mxu0 %v194
    %217 = vmatprep.subr.bf16.mxu0 0
    %218 = vmatpush1.bf16.msra.mxu0 %v195
    %219 = vmatprep.subr.bf16.mxu0 0
    %220 = vmatpush1.bf16.msra.mxu0 %v196
    %221 = vmatprep.subr.bf16.mxu0 0
    %222 = vmatpush1.bf16.msra.mxu0 0
    %223 = vmatprep.subr.bf16.mxu0 0
    %224 = vmatpush1.bf16.msra.mxu0 0
    %225 = vmatprep.subr.bf16.mxu0 0
    %226 = vmatpush1.bf16.msra.mxu0 0
    %227 = vmatprep.subr.bf16.mxu0 0
    %228 = vmatpush1.bf16.msra.mxu0 0
    %229 = vmatprep.subr.bf16.mxu0 0
    %230 = vmatpush1.bf16.msra.mxu0 0
    %231 = vmatprep.subr.bf16.mxu0 0
    %232 = vmatpush1.bf16.msra.mxu0 0
    %233 = vmatprep.subr.bf16.mxu0 0
    %234 = vmatpush1.bf16.msra.mxu0 0
    %235 = vmatprep.subr.bf16.mxu0 0
    %236 = vmatpush1.bf16.msra.mxu0 0
    %237 = vmatprep.mubr.bf16.mxu0 0
    %238 = vmatmul.mubr.bf16.gmra.mrb[0].mxu0 %v136
    %v239 = vpop.f32.mrb[0].mxu0
    %v240 = vadd.f32 %v156, %v239
    %v241 = vpop.f32.mrb[0].mxu0
    %v242 = vpop.f32.mrb[0].mxu0
    %v243 = vpop.f32.mrb[0].mxu0
    %244 = vdwg.mxu0
    %v245 = vmax.f32 %v240, 0.0
    %246 = vrot.lane.b32.xlu0 %v245, 96
    %v247 = vpop.permute.xlu0 %246
    %v248 = vmax.f32 %v245, %v247
    %v249 = vpack.c.bf16 %v248, %v248
    %v250 = vld [vmem:[#allocation7] sm:$0xf]
    %v251 = vld [vmem:[#allocation7 + $0x4] sm:$0xf]
    %v252 = vld [vmem:[#allocation7 + $0x8] sm:$0xf]
    %v253 = vld [vmem:[#allocation7 + $0xc] sm:$0xf]
    %v254 = vld [vmem:[#allocation7 + $0x10] sm:$0xf]
    %v255 = vld [vmem:[#allocation7 + $0x14] sm:$0xf]
    %v256 = vld [vmem:[#allocation7 + $0x18] sm:$0xf]
    %v257 = vld [vmem:[#allocation7 + $0x1c] sm:$0xf]
    %v258 = vld [vmem:[#allocation7 + $0x20] sm:$0xf]
    %v259 = vld [vmem:[#allocation7 + $0x24] sm:$0xf]
    %v260 = vld [vmem:[#allocation7 + $0x28] sm:$0xf]
    %v261 = vld [vmem:[#allocation7 + $0x2c] sm:$0xf]
    %v262 = vld [vmem:[#allocation7 + $0x30] sm:$0xf]
    %v263 = vld [vmem:[#allocation7 + $0x34] sm:$0xf]
    %v264 = vld [vmem:[#allocation7 + $0x38] sm:$0xf]
    %v265 = vld [vmem:[#allocation7 + $0x3c] sm:$0xf]
    %v266 = vlaneseq
    %v267 = vshrl.u32 %v266, 7
    %v268 = vsub.s32 0, %v267
    %v269 = vrot.slane %v74, %v268
    %v286 = vunpack.c.l.b16 %v250
    %v287 = vunpack.c.l.b16 %v251
    %v288 = vunpack.c.l.b16 %v252
    %v289 = vunpack.c.l.b16 %v253
    %v290 = vunpack.c.l.b16 %v254
    %v291 = vunpack.c.l.b16 %v255
    %v292 = vunpack.c.l.b16 %v256
    %v293 = vunpack.c.l.b16 %v257
    %v294 = vunpack.c.l.b16 %v258
    %v295 = vunpack.c.l.b16 %v259
    %v296 = vunpack.c.l.b16 %v260
    %v297 = vunpack.c.l.b16 %v261
    %v298 = vunpack.c.l.b16 %v262
    %v299 = vunpack.c.l.b16 %v263
    %v300 = vunpack.c.l.b16 %v264
    %v301 = vunpack.c.l.b16 %v265
    %v302 = vpack.c.b16 %v287, %v286
    %v303 = vpack.c.b16 %v289, %v288
    %v304 = vpack.c.b16 %v291, %v290
    %v305 = vpack.c.b16 %v293, %v292
    %v306 = vpack.c.b16 %v295, %v294
    %v307 = vpack.c.b16 %v297, %v296
    %v308 = vpack.c.b16 %v299, %v298
    %v309 = vpack.c.b16 %v301, %v300
    %318 = vmatprep.subr.bf16.mxu0 0
    %319 = vmatpush1.bf16.msra.mxu0 %v302
    %320 = vmatprep.subr.bf16.mxu0 0
    %321 = vmatpush1.bf16.msra.mxu0 %v303
    %322 = vmatprep.subr.bf16.mxu0 0
    %323 = vmatpush1.bf16.msra.mxu0 %v304
    %324 = vmatprep.subr.bf16.mxu0 0
    %325 = vmatpush1.bf16.msra.mxu0 %v305
    %326 = vmatprep.subr.bf16.mxu0 0
    %327 = vmatpush1.bf16.msra.mxu0 %v306
    %328 = vmatprep.subr.bf16.mxu0 0
    %329 = vmatpush1.bf16.msra.mxu0 %v307
    %330 = vmatprep.subr.bf16.mxu0 0
    %331 = vmatpush1.bf16.msra.mxu0 %v308
    %332 = vmatprep.subr.bf16.mxu0 0
    %333 = vmatpush1.bf16.msra.mxu0 %v309
    %334 = vmatprep.subr.bf16.mxu0 0
    %335 = vmatpush1.bf16.msra.mxu0 0
    %336 = vmatprep.subr.bf16.mxu0 0
    %337 = vmatpush1.bf16.msra.mxu0 0
    %338 = vmatprep.subr.bf16.mxu0 0
    %339 = vmatpush1.bf16.msra.mxu0 0
    %340 = vmatprep.subr.bf16.mxu0 0
    %341 = vmatpush1.bf16.msra.mxu0 0
    %342 = vmatprep.subr.bf16.mxu0 0
    %343 = vmatpush1.bf16.msra.mxu0 0
    %344 = vmatprep.subr.bf16.mxu0 0
    %345 = vmatpush1.bf16.msra.mxu0 0
    %346 = vmatprep.subr.bf16.mxu0 0
    %347 = vmatpush1.bf16.msra.mxu0 0
    %348 = vmatprep.subr.bf16.mxu0 0
    %349 = vmatpush1.bf16.msra.mxu0 0
    %350 = vmatprep.mubr.bf16.mxu0 0
    %351 = vmatmul.mubr.bf16.gmra.mrb[0].mxu0 %v249
    %v352 = vpop.f32.mrb[0].mxu0
    %v353 = vadd.f32 %v269, %v352
    %v354 = vpop.f32.mrb[0].mxu0
    %v355 = vpop.f32.mrb[0].mxu0
    %v356 = vpop.f32.mrb[0].mxu0
    %357 = vdwg.mxu0
    %v358 = vmax.f32 %v353, 0.0
    %v359 = vlaneseq
    %v360 = vshrl.u32 %v359, 7
    %v361 = vsub.s32 0, %v360
    %v362 = vrot.slane %v75, %v361
    %v363 = vmul.f32 %v358, %v362
    %v364 = vlaneseq
    %v365 = vshrl.u32 %v364, 7
    %v366 = vsub.s32 0, %v365
    %v367 = vrot.slane %v76, %v366
    %v368 = vadd.f32 %v363, %v367
    %vm369 = vcmask 1041408
    %v370 = vsel %vm369, %v368, 0.0
    %371 = vadd.xlane.f32.xlu0 %v370
    %v372 = vpop.xlane.xlu0 %371
    %v373 = vxor.u32 %v372, 2147483648
    %v374 = vmul.f32 %v373, 1.442695
    %v375 = vpow.pop %v374
    %v376 = vadd.f32 %v375, 1.0
    %v377 = vrcp.pop %v376
    %v378 = vmul.f32 1.0, %v377
    %vm379 = vcmask 1024
    %380 = vst.msk [vmem:[%s5] sm:$0x3] %vm379, %v378
    // Predicated region
    $region38: #{tpu_custom_call.1} parent=1 // pred_check
      _
    $region39: #{tpu_custom_call.1} parent=1 // pred_check_branch
      %382 = sbr.rel (0) target = $region41
    $region40: #{tpu_custom_call.1} parent=1 // pred_region
      _
    $region41: #{tpu_custom_call.1} parent=1 // pred_fallthru
      _
    // Predicated region
    $region42: #{tpu_custom_call.1} parent=1 // pred_check
      _
    $region43: #{tpu_custom_call.1} parent=1 // pred_check_branch
      %384 = sbr.rel (0) target = $region45
    $region44: #{tpu_custom_call.1} parent=1 // pred_region
      _
    $region45: #{tpu_custom_call.1} parent=1 // pred_fallthru
      _
    %385 = vsyncpa [#allocation3], 1
    %386 = vsyncpa [#allocation5], 1
    %387 = vsyncpa [#allocation8], 1

</llo_original>
